<compile_context>
chip_gen: v7x
topology: tpu7x:2x2x1
jax: 0.10.0
libtpu: 0.0.40
codegen_flags: <defaults>
</compile_context>

<pallas_src>
import functools

import jax
import jax.numpy as jnp
from jax.experimental import pallas as pl
from jax.experimental.pallas import tpu as pltpu

REPR_DIM = 75
FEATURE_DIM = 32
BN_EPS = 1e-5


def _encoder_kernel(x_ref, w_ref, gb_ref, o_ref, *, n_valid):
    """Single-block path: the whole problem lives in one VMEM-resident block."""
    x = x_ref[...]                                    # (B, D)
    w = w_ref[...]                                    # (F, D)  PyTorch (out, in)
    # y = obs @ w.T on the MXU (bias omitted: cancelled by BN mean-subtract).
    y = jax.lax.dot_general(x, w, (((1,), (1,)), ((), ())),
                            preferred_element_type=jnp.float32)   # (B, F)
    inv_n = 1.0 / n_valid
    mean = jnp.sum(y, axis=0, keepdims=True) * inv_n              # (1, F)
    c = y - mean
    var = jnp.sum(c * c, axis=0, keepdims=True) * inv_n           # biased var
    # Fused BN affine + ReLU: out = max(y * scale + shift, 0)
    scale = gb_ref[0:1, :] * jax.lax.rsqrt(var + BN_EPS)          # gamma row
    shift = gb_ref[1:2, :] - mean * scale                         # beta row
    o_ref[...] = jnp.maximum(y * scale + shift, 0.0)


def _encoder_tiled_kernel(x_ref, w_ref, gb_ref, o_ref, stat_ref, *, n_valid, tb):
    """Batch-tiled path: stream x tiles, accumulate BN stats, finalize at end."""
    i = pl.program_id(0)
    nt = pl.cdiv(n_valid, tb)            # static trip count
    rem = n_valid - (nt - 1) * tb        # static #rows in the last (ragged) tile

    @pl.when(i == 0)
    def _():
        stat_ref[...] = jnp.zeros_like(stat_ref)

    # Zero rows past the valid batch (only matters for the ragged last tile,
    # whose out-of-bounds block region holds undefined data).
    row = jax.lax.broadcasted_iota(jnp.int32, (tb, 1), 0) + i * tb
    x = jnp.where(row < n_valid, x_ref[...], 0.0)                 # (tb, D)

    y = jax.lax.dot_general(x, w_ref[...], (((1,), (1,)), ((), ())),
                            preferred_element_type=jnp.float32)   # (tb, F)

    # BN running sums (invalid rows contribute exact zeros).
    stat_ref[0:1, :] += jnp.sum(y, axis=0, keepdims=True)
    stat_ref[1:2, :] += jnp.sum(y * y, axis=0, keepdims=True)

    @pl.when(i < nt - 1)
    def _():
        o_ref[pl.ds(i * tb, tb), :] = y

    @pl.when(i == nt - 1)
    def _():
        # Store the (possibly ragged) last tile, then finalize the fused
        # BN affine + ReLU over the full VMEM-resident output.
        o_ref[pl.ds((nt - 1) * tb, rem), :] = y[:rem]
        inv_n = 1.0 / n_valid
        mean = stat_ref[0:1, :] * inv_n
        var = jnp.maximum(stat_ref[1:2, :] * inv_n - mean * mean, 0.0)
        scale = gb_ref[0:1, :] * jax.lax.rsqrt(var + BN_EPS)
        shift = gb_ref[1:2, :] - mean * scale
        o_ref[...] = jnp.maximum(o_ref[...] * scale + shift, 0.0)


def encoder_forward(obs, w, b, gamma, beta, *, block_b=1024):
    """h = ReLU(BatchNorm1d(Linear(obs))), BatchNorm in training mode.

    obs:   (B, D_in) float32
    w:     (F, D_in) float32 (PyTorch nn.Linear layout: out x in)
    b:     (F,)      float32 (unused: cancelled exactly by train-mode BatchNorm)
    gamma: (F,)      float32 (BatchNorm weight)
    beta:  (F,)      float32 (BatchNorm bias)
    returns (B, F) float32
    """
    del b  # mathematically dead under training-mode BatchNorm (mean-subtract)
    obs = obs.astype(jnp.float32)
    w = w.astype(jnp.float32)
    B, d_in = obs.shape
    f, d_in2 = w.shape
    assert d_in == d_in2
    gb = jnp.stack([gamma.astype(jnp.float32), beta.astype(jnp.float32)])  # (2,F)

    if B <= block_b:
        # Single block, no grid, no padding, no wrapper layout ops.
        full = lambda shape: pl.BlockSpec(shape, lambda: (0,) * len(shape))
        return pl.pallas_call(
            functools.partial(_encoder_kernel, n_valid=B),
            out_shape=jax.ShapeDtypeStruct((B, f), jnp.float32),
            in_specs=[full((B, d_in)),    # obs (unpadded)
                      full((f, d_in)),    # weight (unpadded)
                      full((2, f))],      # gamma/beta
            out_specs=full((B, f)),
        )(obs, w, gb)

    # Batch-tiled path for large B: streams x tiles (pipelined DMA), keeps the
    # small (B, F) output resident in VMEM and finalizes on the last step.
    # Resident footprint ~ B*F*4 bytes; keep well inside v7x's 64 MiB VMEM.
    assert B * f * 4 <= 16 * 1024 * 1024, "batch too large for resident output"
    # TODO(synk): for even larger B, stream output tiles with a two-phase grid;
    # and the real end-to-end win is fusing the downstream trunk layer so the
    # (B, F) activation never round-trips HBM (not possible in isolation).
    tb = block_b
    nt = pl.cdiv(B, tb)
    return pl.pallas_call(
        functools.partial(_encoder_tiled_kernel, n_valid=B, tb=tb),
        out_shape=jax.ShapeDtypeStruct((B, f), jnp.float32),
        grid_spec=pltpu.PrefetchScalarGridSpec(
            num_scalar_prefetch=0,
            grid=(nt,),
            in_specs=[
                pl.BlockSpec((tb, d_in), lambda i: (i, 0)),   # obs tile (streamed)
                pl.BlockSpec((f, d_in), lambda i: (0, 0)),    # weight (resident)
                pl.BlockSpec((2, f), lambda i: (0, 0)),       # gamma/beta
            ],
            out_specs=pl.BlockSpec((B, f), lambda i: (0, 0)),  # resident output
            scratch_shapes=[pltpu.VMEM((2, f), jnp.float32)],  # BN sum / sumsq
        ),
        compiler_params=pltpu.CompilerParams(
            dimension_semantics=("arbitrary",)),
    )(obs, w, gb)


def init_params(key, d_in=REPR_DIM, feat=FEATURE_DIM):
    # Deterministic synthetic init (stands in for utils.weight_init's
    # orthogonal init; shapes match nn.Linear(75, feat) + BatchNorm1d(feat)).
    k_w, k_b = jax.random.split(key)
    w = jax.random.normal(k_w, (feat, d_in), jnp.float32) / jnp.sqrt(d_in)
    b = jax.random.normal(k_b, (feat,), jnp.float32) * 0.01
    gamma = jnp.ones((feat,), jnp.float32)   # BatchNorm weight init
    beta = jnp.zeros((feat,), jnp.float32)   # BatchNorm bias init
    return w, b, gamma, beta


def reference_forward(obs, w, b, gamma, beta):
    # Faithful PyTorch-order reference (includes the Linear bias; the kernel
    # omits it because train-mode BatchNorm cancels it exactly).
    y = obs @ w.T + b
    mean = jnp.mean(y, axis=0, keepdims=True)
    var = jnp.mean((y - mean) ** 2, axis=0, keepdims=True)
    y = (y - mean) * jax.lax.rsqrt(var + BN_EPS)
    return jnp.maximum(y * gamma + beta, 0.0)


if __name__ == "__main__":
    key = jax.random.PRNGKey(0)
    k_obs, k_obs2, k_params = jax.random.split(key, 3)
    w, b, gamma, beta = init_params(k_params)

    # Small batch -> single-block path (the module's typical use).
    B = 8
    obs = jax.random.normal(k_obs, (B, REPR_DIM), jnp.float32)
    out = jax.block_until_ready(encoder_forward(obs, w, b, gamma, beta))
    ref = reference_forward(obs, w, b, gamma, beta)
    assert out.shape == (B, FEATURE_DIM)
    assert jnp.allclose(out, ref, atol=1e-4, rtol=1e-4)

    # Larger batch with a ragged last tile -> batch-tiled grid path.
    B2 = 300
    obs2 = jax.random.normal(k_obs2, (B2, REPR_DIM), jnp.float32)
    out2 = jax.block_until_ready(
        encoder_forward(obs2, w, b, gamma, beta, block_b=128))
    ref2 = reference_forward(obs2, w, b, gamma, beta)
    assert out2.shape == (B2, FEATURE_DIM)
    assert jnp.allclose(out2, ref2, atol=1e-4, rtol=1e-4)

    print("KERNEL_OK")
</pallas_src>

<mosaic_0001>
module attributes {stable_mosaic.version = 11 : i64} {
  func.func @_encoder_kernel(%arg0: memref<8x75xf32, #tpu.memory_space<vmem>>, %arg1: memref<32x75xf32, #tpu.memory_space<vmem>>, %arg2: memref<2x32xf32, #tpu.memory_space<vmem>>, %arg3: memref<8x32xf32, #tpu.memory_space<vmem>>) attributes {dimension_semantics = [], scalar_prefetch = 0 : i64, scratch_operands = 0 : i64, tpu.core_type = #tpu.core_type<tc>} {
    %c0 = arith.constant 0 : index
    %c0_0 = arith.constant 0 : index
    %0 = vector.load %arg0[%c0, %c0_0] : memref<8x75xf32, #tpu.memory_space<vmem>>, vector<8x75xf32>
    %c0_1 = arith.constant 0 : index
    %c0_2 = arith.constant 0 : index
    %1 = vector.load %arg1[%c0_1, %c0_2] : memref<32x75xf32, #tpu.memory_space<vmem>>, vector<32x75xf32>
    %cst = arith.constant dense<0.000000e+00> : vector<8x32xf32>
    %2 = tpu.matmul %0, %1, %cst {dimension_numbers = #tpu.dot_dimension_numbers<[1], [1], [0], [0], [0, 0, 1, 0], [], []>} : vector<8x75xf32>, vector<32x75xf32>, vector<8x32xf32> -> vector<8x32xf32>
    %cst_3 = arith.constant dense<0.000000e+00> : vector<32xf32>
    %3 = vector.multi_reduction <add>, %2, %cst_3 [0] : vector<8x32xf32> to vector<32xf32>
    %4 = vector.shape_cast %3 : vector<32xf32> to vector<1x32xf32>
    %cst_4 = arith.constant 1.250000e-01 : f32
    %5 = vector.broadcast %cst_4 : f32 to vector<1x32xf32>
    %6 = arith.mulf %4, %5 : vector<1x32xf32>
    %7 = vector.broadcast %6 : vector<1x32xf32> to vector<8x32xf32>
    %8 = arith.subf %2, %7 : vector<8x32xf32>
    %9 = arith.mulf %8, %8 : vector<8x32xf32>
    %cst_5 = arith.constant dense<0.000000e+00> : vector<32xf32>
    %10 = vector.multi_reduction <add>, %9, %cst_5 [0] : vector<8x32xf32> to vector<32xf32>
    %11 = vector.shape_cast %10 : vector<32xf32> to vector<1x32xf32>
    %cst_6 = arith.constant 1.250000e-01 : f32
    %12 = vector.broadcast %cst_6 : f32 to vector<1x32xf32>
    %13 = arith.mulf %11, %12 : vector<1x32xf32>
    %c0_7 = arith.constant 0 : index
    %c0_8 = arith.constant 0 : index
    %14 = vector.load %arg2[%c0_7, %c0_8] : memref<2x32xf32, #tpu.memory_space<vmem>>, vector<1x32xf32>
    %cst_9 = arith.constant 9.99999974E-6 : f32
    %15 = vector.broadcast %cst_9 : f32 to vector<1x32xf32>
    %16 = arith.addf %13, %15 : vector<1x32xf32>
    %17 = math.rsqrt %16 : vector<1x32xf32>
    %18 = arith.mulf %14, %17 : vector<1x32xf32>
    %c1 = arith.constant 1 : index
    %c0_10 = arith.constant 0 : index
    %19 = vector.load %arg2[%c1, %c0_10] : memref<2x32xf32, #tpu.memory_space<vmem>>, vector<1x32xf32>
    %20 = arith.mulf %6, %18 : vector<1x32xf32>
    %21 = arith.subf %19, %20 : vector<1x32xf32>
    %22 = vector.broadcast %18 : vector<1x32xf32> to vector<8x32xf32>
    %23 = arith.mulf %2, %22 : vector<8x32xf32>
    %24 = vector.broadcast %21 : vector<1x32xf32> to vector<8x32xf32>
    %25 = arith.addf %23, %24 : vector<8x32xf32>
    %cst_11 = arith.constant 0.000000e+00 : f32
    %26 = vector.broadcast %cst_11 : f32 to vector<8x32xf32>
    %27 = arith.maximumf %25, %26 : vector<8x32xf32>
    %c0_12 = arith.constant 0 : index
    %c0_13 = arith.constant 0 : index
    %28 = vector.load %arg3[%c0_12, %c0_13] : memref<8x32xf32, #tpu.memory_space<vmem>>, vector<8x32xf32>
    tpu.vector_store %arg3[%c0_12, %c0_13], %27 {strides = array<i32>} : memref<8x32xf32, #tpu.memory_space<vmem>>, vector<8x32xf32>,
    return
  }
}

</mosaic_0001>

<llo_original>
// kernel: tpu_custom_call.1
$region0: #{tpu_custom_call.1}
  #allocation0 [shape = 'u32[]', space=smem, size = 0x4, offset = 0x4, fixed_abs, tag = 'smem constant byte address 0x4 - core index']
  #allocation1 [shape = 'u32[144,128]{1,0:T(1,128)}', space=vmem, size = 0x12000, scoped, tag = 'internal scratch']
  %s0 = inlined_call_operand.hbm [shape: f32[8,75], index: 0, kind: input, shape index: {}]
  %s1 = inlined_call_operand.hbm [shape: f32[32,75], index: 1, kind: input, shape index: {}]
  %s2 = inlined_call_operand.vmem [shape: f32[2,32], index: 2, kind: input, shape index: {}]
  %s3 = inlined_call_operand.hbm [shape: f32[8,32], index: 3, kind: output, shape index: {}]
  %s4 = sld [smem:[#allocation0]]
  $region30: #{tpu_custom_call.1} parent=0
    _
  %s6 = ssub.s32 1, %s4
  %s7 = scalar_select 0, %s6, %s4
  $region1: #{tpu_custom_call.1} parent=0
    #allocation2 [shape = 'u8[4096]{0}', space=vmem, size = 0x1000, scoped, tag = 'input window, operand 0, single buffered']
    #allocation3 [shape = 's32[1]{0}', space=sflag, size = 0x4, scoped, tag = 'scoped memory for tpu_custom_call.1']
    #allocation4 [shape = 's32[1]{0}', space=sflag, size = 0x4, scoped, tag = 'scoped memory for tpu_custom_call.1']
    #allocation5 [shape = 'u8[16384]{0}', space=vmem, size = 0x4000, scoped, tag = 'input window, operand 1, single buffered']
    #allocation6 [shape = 's32[1]{0}', space=sflag, size = 0x4, scoped, tag = 'scoped memory for tpu_custom_call.1']
    #allocation7 [shape = 'u8[4096]{0}', space=vmem, size = 0x1000, scoped, tag = 'output window, operand 0, single buffered']
    %8 = vsyncpa [#allocation3], 0
    %9 = vsyncpa [#allocation6], 0
    %10 = vsyncpa [#allocation4], 0
    // Predicated region
    $region2: #{tpu_custom_call.1} parent=1 // pred_check
      _
    $region3: #{tpu_custom_call.1} parent=1 // pred_check_branch
      %12 = sbr.rel (0) target = $region5
    $region4: #{tpu_custom_call.1} parent=1 // pred_region
      %s14 = ssub.s32 128, 128
      %15 = vsyncadd [#allocation3], %s14
      %s17 = sshll.u32 [#allocation2], 4
      %s18 = int_to_ptr.vmem [resolvable:$true] %s17
      %20 = dma.hbm_to_vmem [thread:$0]  %s0, 128, %s18, [#allocation3]
    $region5: #{tpu_custom_call.1} parent=1 // pred_fallthru
      _
    // Predicated region
    $region6: #{tpu_custom_call.1} parent=1 // pred_check
      _
    $region7: #{tpu_custom_call.1} parent=1 // pred_check_branch
      %22 = sbr.rel (0) target = $region9
    $region8: #{tpu_custom_call.1} parent=1 // pred_region
      %s24 = ssub.s32 512, 512
      %25 = vsyncadd [#allocation6], %s24
      %s26 = sshll.u32 [#allocation5], 4
      %s27 = int_to_ptr.vmem [resolvable:$true] %s26
      %32 = dma.hbm_to_vmem [thread:$0]  %s1, 512, %s27, [#allocation6], 128, 128, 8
    $region9: #{tpu_custom_call.1} parent=1 // pred_fallthru
      _
    // Predicated region
    $region10: #{tpu_custom_call.1} parent=1 // pred_check
      _
    $region11: #{tpu_custom_call.1} parent=1 // pred_check_branch
      %34 = sbr.rel (0) target = $region13
    $region12: #{tpu_custom_call.1} parent=1 // pred_region
      _
    $region13: #{tpu_custom_call.1} parent=1 // pred_fallthru
      _
    // Predicated region
    $region14: #{tpu_custom_call.1} parent=1 // pred_check
      _
    $region15: #{tpu_custom_call.1} parent=1 // pred_check_branch
      %36 = sbr.rel (0) target = $region17
    $region16: #{tpu_custom_call.1} parent=1 // pred_region
      %37 = dma.done [#allocation3], 128
    $region17: #{tpu_custom_call.1} parent=1 // pred_fallthru
      _
    // Predicated region
    $region18: #{tpu_custom_call.1} parent=1 // pred_check
      _
    $region19: #{tpu_custom_call.1} parent=1 // pred_check_branch
      %39 = sbr.rel (0) target = $region21
    $region20: #{tpu_custom_call.1} parent=1 // pred_region
      %40 = dma.done [#allocation6], 512
    $region21: #{tpu_custom_call.1} parent=1 // pred_fallthru
      _
    %v41 = vld [vmem:[#allocation2] sm:$0xff]
    %v42 = vld [vmem:[#allocation5] sm:$0xff]
    %v43 = vld [vmem:[#allocation5 + $0x8] sm:$0xff]
    %v44 = vld [vmem:[#allocation5 + $0x10] sm:$0xff]
    %v45 = vld [vmem:[#allocation5 + $0x18] sm:$0xff]
    %vm46 = vcmask 613376
    %v48 = vsel %vm46, %v41, 0
    %v51 = vsel %vm46, %v42, 0
    %v54 = vsel %vm46, %v43, 0
    %v57 = vsel %vm46, %v44, 0
    %v60 = vsel %vm46, %v45, 0
    %62 = vmatprep.subr.mxu0 0.0
    %63 = vmatpush1.xpose.msra.mxu0 %v51
    %64 = vmatprep.subr.mxu0 0.0
    %65 = vmatpush1.xpose.msra.mxu0 %v54
    %66 = vmatprep.subr.mxu0 0.0
    %67 = vmatpush1.xpose.msra.mxu0 %v57
    %68 = vmatprep.subr.mxu0 0.0
    %69 = vmatpush1.xpose.msra.mxu0 %v60
    %70 = vmatprep.subr.mxu0 0.0
    %71 = vmatpush1.xpose.msra.mxu0 0.0
    %72 = vmatprep.subr.mxu0 0.0
    %73 = vmatpush1.xpose.msra.mxu0 0.0
    %74 = vmatprep.subr.mxu0 0.0
    %75 = vmatpush1.xpose.msra.mxu0 0.0
    %76 = vmatprep.subr.mxu0 0.0
    %77 = vmatpush1.xpose.msra.mxu0 0.0
    %78 = vmatprep.subr.mxu0 0.0
    %79 = vmatpush1.xpose.msra.mxu0 0.0
    %80 = vmatprep.subr.mxu0 0.0
    %81 = vmatpush1.xpose.msra.mxu0 0.0
    %82 = vmatprep.subr.mxu0 0.0
    %83 = vmatpush1.xpose.msra.mxu0 0.0
    %84 = vmatprep.subr.mxu0 0.0
    %85 = vmatpush1.xpose.msra.mxu0 0.0
    %86 = vmatprep.subr.mxu0 0.0
    %87 = vmatpush1.xpose.msra.mxu0 0.0
    %88 = vmatprep.subr.mxu0 0.0
    %89 = vmatpush1.xpose.msra.mxu0 0.0
    %90 = vmatprep.subr.mxu0 0.0
    %91 = vmatpush1.xpose.msra.mxu0 0.0
    %92 = vmatprep.subr.mxu0 0.0
    %93 = vmatpush1.xpose.msra.mxu0 0.0
    %94 = vmatprep.subr.mxu0 0.0
    %95 = vmatpush1.xpose.msra.mxu0 0.0
    %96 = vmatprep.subr.mxu0 0.0
    %97 = vmatpush1.xpose.msra.mxu0 0.0
    %98 = vmatprep.subr.mxu0 0.0
    %99 = vmatpush1.xpose.msra.mxu0 0.0
    %100 = vmatprep.subr.mxu0 0.0
    %101 = vmatpush1.xpose.msra.mxu0 0.0
    %102 = vmatprep.subr.mxu0 0.0
    %103 = vmatpush1.xpose.msra.mxu0 0.0
    %104 = vmatprep.subr.mxu0 0.0
    %105 = vmatpush1.xpose.msra.mxu0 0.0
    %106 = vmatprep.subr.mxu0 0.0
    %107 = vmatpush1.xpose.msra.mxu0 0.0
    %108 = vmatprep.subr.mxu0 0.0
    %109 = vmatpush1.xpose.msra.mxu0 0.0
    %110 = vmatprep.subr.mxu0 0.0
    %111 = vmatpush1.xpose.msra.mxu0 0.0
    %112 = vmatprep.subr.mxu0 0.0
    %113 = vmatpush1.xpose.msra.mxu0 0.0
    %114 = vmatprep.subr.mxu0 0.0
    %115 = vmatpush1.xpose.msra.mxu0 0.0
    %116 = vmatprep.subr.mxu0 0.0
    %117 = vmatpush1.xpose.msra.mxu0 0.0
    %118 = vmatprep.subr.mxu0 0.0
    %119 = vmatpush1.xpose.msra.mxu0 0.0
    %120 = vmatprep.subr.mxu0 0.0
    %121 = vmatpush1.xpose.msra.mxu0 0.0
    %122 = vmatprep.subr.mxu0 0.0
    %123 = vmatpush1.xpose.msra.mxu0 0.0
    %124 = vmatprep.subr.mxu0 0.0
    %125 = vmatpush1.xpose.msra.mxu0 0.0
    %126 = vmatprep.mubr.f32.mxu0 0.0
    %127 = vmatmul.mubr.f32.gmra.mrb[0].mxu0 %v48
    %v128 = vpop.f32.mrb[0].mxu0
    %v129 = vadd.f32 0.0, %v128
    %v130 = vpop.f32.mrb[0].mxu0
    %131 = vdwg.mxu0
    %vm132 = vcmask 261120
    %v133 = vsel %vm132, %v129, 0.0
    %v134 = vrot.slane %v133, 4
    %v135 = vadd.f32 %v133, %v134
    %v136 = vrot.slane %v135, 2
    %v137 = vadd.f32 %v135, %v136
    %v138 = vrot.slane %v137, 1
    %v139 = vadd.f32 %v137, %v138
    %v140 = vmul.f32 %v139, 0.125
    %v141 = vsub.f32 %v129, %v140
    %v142 = vmul.f32 %v141, %v141
    %v143 = vsel %vm132, %v142, 0.0
    %v144 = vrot.slane %v143, 4
    %v145 = vadd.f32 %v143, %v144
    %v146 = vrot.slane %v145, 2
    %v147 = vadd.f32 %v145, %v146
    %v148 = vrot.slane %v147, 1
    %v149 = vadd.f32 %v147, %v148
    %v150 = vmul.f32 %v149, 0.125
    %v151 = vld [vmem:[%s2] sm:$0x1]
    %v152 = vadd.f32 %v150, 1e-05
    %v153 = vrsqrt.pop %v152
    %v154 = vmul.f32 %v151, %v153
    %v155 = vld [vmem:[%s2 + $0x1] sm:$0x1]
    %v156 = vmul.f32 %v140, %v154
    %v157 = vsub.f32 %v155, %v156
    %v158 = vlaneseq
    %v159 = vshrl.u32 %v158, 7
    %v160 = vsub.s32 0, %v159
    %v161 = vrot.slane %v154, %v160
    %v162 = vmul.f32 %v129, %v161
    %v163 = vlaneseq
    %v164 = vshrl.u32 %v163, 7
    %v165 = vsub.s32 0, %v164
    %v166 = vrot.slane %v157, %v165
    %v167 = vadd.f32 %v162, %v166
    %v168 = vmax.f32 %v167, 0.0
    %169 = vst.msk [vmem:[#allocation7] sm:$0xff] %vm132, %v168
    // Predicated region
    $region22: #{tpu_custom_call.1} parent=1 // pred_check
      _
    $region23: #{tpu_custom_call.1} parent=1 // pred_check_branch
      %171 = sbr.rel (0) target = $region25
    $region24: #{tpu_custom_call.1} parent=1 // pred_region
      %s173 = ssub.s32 128, 128
      %174 = vsyncadd [#allocation4], %s173
      %s176 = sshll.u32 [#allocation7], 4
      %s177 = int_to_ptr.vmem [resolvable:$true] %s176
      %179 = dma.vmem_to_hbm [thread:$0]  %s177, 128, %s3, [#allocation4]
    $region25: #{tpu_custom_call.1} parent=1 // pred_fallthru
      _
    // Predicated region
    $region26: #{tpu_custom_call.1} parent=1 // pred_check
      _
    $region27: #{tpu_custom_call.1} parent=1 // pred_check_branch
      %181 = sbr.rel (0) target = $region29
    $region28: #{tpu_custom_call.1} parent=1 // pred_region
      %182 = dma.done [#allocation4], 128
    $region29: #{tpu_custom_call.1} parent=1 // pred_fallthru
      _
    %183 = vsyncpa [#allocation3], 1
    %184 = vsyncpa [#allocation6], 1
    %185 = vsyncpa [#allocation4], 1

</llo_original>
